<compile_context>
chip_gen: v7x
topology: tpu7x:2x2x1
jax: 0.10.0
libtpu: 0.0.40
codegen_flags: <defaults>
</compile_context>

<pallas_src>
import math

import jax
import jax.numpy as jnp
from jax import lax
from jax.experimental import pallas as pl
from jax.experimental.pallas import tpu as pltpu


# ----------------------------------------------------------------------------
# Fused kernel
# ----------------------------------------------------------------------------
def _make_fused_kernel(*, num_heads, num_groups, head_dim, hidden_out, seq_q,
                       qkv_width, has_rope, has_mask, has_cache, is_causal,
                       s_past):
    repeat = num_heads // num_groups
    q_sz = num_heads * head_dim
    kv_w = num_groups * head_dim

    def kernel(*refs):
        it = iter(refs)
        x_ref = next(it)
        wqkv_ref = next(it)
        bqkv_ref = next(it)
        cos_ref = sine_ref = sino_ref = None
        if has_rope:
            cos_ref, sine_ref, sino_ref = next(it), next(it), next(it)
        wd_ref = next(it)
        mask_ref = next(it) if has_mask else None
        kp_ref = next(it) if has_cache else None
        vp_ref = next(it) if has_cache else None
        out_ref = next(it)
        ctx_sc = next(it)

        # ---- fused QKV projection (bf16 weights from HBM, f32 accumulation);
        #      softmax scale is already folded into the Q columns of W/b ----
        x = x_ref[0].astype(jnp.bfloat16)                          # [S, H]
        mixed = jnp.dot(x, wqkv_ref[...],
                        preferred_element_type=jnp.float32) + bqkv_ref[...]

        # ---- rotary on the whole 128-lane QKV slab via XLU lane rolls ----
        # out[2i]   = x[2i]*cos - x[2i+1]*sin   (sine table: -sin at even lanes)
        # out[2i+1] = x[2i+1]*cos + x[2i]*sin   (sino table: +sin at odd lanes)
        # cos=1 / sin=0 over the V columns and the rotary pass-through half.
        if has_rope:
            nxt = pltpu.roll(mixed, qkv_width - 1, 1)   # lane j <- x[j+1]
            prv = pltpu.roll(mixed, 1, 1)               # lane j <- x[j-1]
            qkv = mixed * cos_ref[...] + nxt * sine_ref[...] + prv * sino_ref[...]
        else:
            qkv = mixed

        # new K (rotated) and V go straight into the packed output slab
        out_ref[:, hidden_out:] = qkv[:, q_sz:].astype(out_ref.dtype)

        k_new = qkv[:, q_sz:q_sz + kv_w]                           # [S, G*HD]
        v_new = qkv[:, q_sz + kv_w:]
        if has_cache:
            # TODO(synk): production decode should update a preallocated HBM cache
            # in place (input_output_aliases) and stream past K/V tiles
            # flash-style instead of concatenating in VMEM every step.
            k_all = jnp.concatenate([kp_ref[0], k_new], axis=0)
            v_all = jnp.concatenate([vp_ref[0], v_new], axis=0)
        else:
            k_all, v_all = k_new, v_new
        s_kv = k_all.shape[0]

        q_bf = qkv[:, :q_sz].astype(jnp.bfloat16)
        k_bf = k_all.astype(jnp.bfloat16)
        v_bf = v_all.astype(jnp.bfloat16)

        # mask shared by every group; rows are (head_in_group, query_position)
        keep = None
        if has_mask:
            m = mask_ref[0].astype(jnp.int32)                      # [S, S_kv]
            if repeat > 1:
                m = jnp.concatenate([m] * repeat, axis=0)
            keep = m != 0                                          # True = attend
        elif is_causal:
            row = lax.broadcasted_iota(jnp.int32, (repeat * seq_q, s_kv), 0)
            qpos = row % seq_q + s_past
            kpos = lax.broadcasted_iota(jnp.int32, (repeat * seq_q, s_kv), 1)
            keep = qpos >= kpos

        # ---- GQA attention: one logits + one p@V matmul per group ----
        for g in range(num_groups):
            h0 = g * repeat
            # stack the group's query heads along the sublane (row) dim
            q_rows = jnp.concatenate(
                [q_bf[:, (h0 + r) * head_dim:(h0 + r + 1) * head_dim]
                 for r in range(repeat)], axis=0)                  # [R*S, HD]
            k_g = k_bf[:, g * head_dim:(g + 1) * head_dim]         # [S_kv, HD]
            v_g = v_bf[:, g * head_dim:(g + 1) * head_dim]

            s_g = lax.dot_general(q_rows, k_g, (((1,), (1,)), ((), ())),
                                  preferred_element_type=jnp.float32)
            if keep is not None:
                # finite -1e30: fully masked rows give uniform weights, not NaN
                s_g = jnp.where(keep, s_g, -1e30)
            m_g = jnp.max(s_g, axis=-1, keepdims=True)
            p = jnp.exp(s_g - m_g)
            l = jnp.sum(p, axis=-1, keepdims=True)
            p = p * pl.reciprocal(l, approx=True)                  # EUP
            ctx = jnp.dot(p.astype(jnp.bfloat16), v_g,
                          preferred_element_type=jnp.float32)      # [R*S, HD]

            # scatter per-head context to fixed offsets in the VMEM ctx scratch
            for r in range(repeat):
                h = h0 + r
                ctx_sc[:, h * head_dim:(h + 1) * head_dim] = (
                    ctx[r * seq_q:(r + 1) * seq_q, :].astype(ctx_sc.dtype))

        # ---- output projection (add_bias_linear=False -> no bias) ----
        proj = jnp.dot(ctx_sc[...], wd_ref[...],
                       preferred_element_type=jnp.float32)
        out_ref[:, :hidden_out] = proj.astype(out_ref.dtype)

    return kernel


# ----------------------------------------------------------------------------
# Trace-time rotary tables (full QKV width, identity over the V block)
# ----------------------------------------------------------------------------
def _rotary_tables(rotary_pos_emb, seq_len, head_dim, num_heads, num_groups,
                   dtype=jnp.float32):
    q_sz = num_heads * head_dim
    kv_w = num_groups * head_dim
    rope = rotary_pos_emb[:seq_len].reshape(seq_len, -1, 2).astype(dtype)
    n_pairs = rope.shape[1]
    rot_dim = 2 * n_pairs
    pad = head_dim - rot_dim
    cos_p, sin_p = rope[..., 0], rope[..., 1]
    zeros_p = jnp.zeros_like(sin_p)

    def head_tab(even, odd, pad_val):
        t = jnp.stack([even, odd], axis=-1).reshape(seq_len, rot_dim)
        return jnp.concatenate(
            [t, jnp.full((seq_len, pad), pad_val, dtype)], axis=-1)

    cos_h = head_tab(cos_p, cos_p, 1.0)          # cos at both pair lanes
    sine_h = head_tab(-sin_p, zeros_p, 0.0)      # -sin at even lanes
    sino_h = head_tab(zeros_p, sin_p, 0.0)       # +sin at odd lanes

    def widen(h, v_fill):
        return jnp.concatenate(
            [jnp.tile(h, (1, num_heads)),        # Q heads
             jnp.tile(h, (1, num_groups)),       # K groups
             jnp.full((seq_len, kv_w), v_fill, dtype)], axis=-1)  # V: identity

    return widen(cos_h, 1.0), widen(sine_h, 0.0), widen(sino_h, 0.0)


# ----------------------------------------------------------------------------
# SelfAttention.forward
# ----------------------------------------------------------------------------
def self_attention_forward(hidden_states, attention_mask, rotary_pos_emb, params,
                           kv_cache=None, use_cache=True, is_causal=False):
    """hidden_states [S, B, H]; attention_mask [B, 1, S, S_kv] bool with
    True = attend (SDPA convention of this module) or None; rotary_pos_emb
    [S, 1, head_dim//4, 2] for the CURRENT positions (module uses [:S]) or None.
    Returns (output [S, B, H], kv_cache=(k, v) each [S_kv, B, G, HD])."""
    NH, G, HD = params["num_heads"], params["num_groups"], params["head_dim"]
    S, B, H = hidden_states.shape
    q_sz, kv_w = NH * HD, G * HD
    qkv_width = q_sz + 2 * kv_w
    pack_w = H + 2 * kv_w                       # packed output lanes per batch
    dtype = hidden_states.dtype
    has_rope = rotary_pos_emb is not None
    has_mask = attention_mask is not None
    has_cache = kv_cache is not None
    s_past = kv_cache[0].shape[0] if has_cache else 0
    s_kv = s_past + S

    # fold 1/sqrt(HD) into the Q columns of the QKV weight + bias; bf16 weights
    scale = 1.0 / math.sqrt(HD)
    col_scale = jnp.concatenate([jnp.full((q_sz,), scale, jnp.float32),
                                 jnp.ones((2 * kv_w,), jnp.float32)])
    w_qkv = (params["w_qkv"].astype(jnp.float32)
             * col_scale[None, :]).astype(jnp.bfloat16)
    b_qkv = (params["b_qkv"].astype(jnp.float32) * col_scale).reshape(1, qkv_width)
    w_dense = params["w_dense"].astype(jnp.bfloat16)

    # One boundary relayout: (S,1,H) blocks on [S,B,H] violate the (8,128)
    # second-minor tiling constraint when B < 8, so go batch-major here.
    x_b = jnp.transpose(hidden_states, (1, 0, 2))                  # [B, S, H]

    operands = [x_b, w_qkv, b_qkv]
    in_specs = [pl.BlockSpec((1, S, H), lambda b: (b, 0, 0)),
                pl.BlockSpec((H, qkv_width), lambda b: (0, 0)),
                pl.BlockSpec((1, qkv_width), lambda b: (0, 0))]
    if has_rope:
        cos_t, sine_t, sino_t = _rotary_tables(rotary_pos_emb, S, HD, NH, G)
        operands += [cos_t, sine_t, sino_t]
        in_specs += [pl.BlockSpec((S, qkv_width), lambda b: (0, 0))] * 3
    operands.append(w_dense)
    in_specs.append(pl.BlockSpec((q_sz, H), lambda b: (0, 0)))
    if has_mask:
        mask_i8 = attention_mask.reshape(B, S, s_kv).astype(jnp.int8)
        operands.append(mask_i8)
        in_specs.append(pl.BlockSpec((1, S, s_kv), lambda b: (b, 0, 0)))
    if has_cache:
        kp = jnp.transpose(kv_cache[0], (1, 0, 2, 3)).reshape(B, s_past, kv_w)
        vp = jnp.transpose(kv_cache[1], (1, 0, 2, 3)).reshape(B, s_past, kv_w)
        operands += [kp, vp]
        in_specs += [pl.BlockSpec((1, s_past, kv_w), lambda b: (b, 0, 0))] * 2

    kernel = _make_fused_kernel(
        num_heads=NH, num_groups=G, head_dim=HD, hidden_out=H, seq_q=S,
        qkv_width=qkv_width, has_rope=has_rope, has_mask=has_mask,
        has_cache=has_cache, is_causal=is_causal, s_past=s_past)

    # Packed lane-dense output: per-batch 128-lane slab [attn_out | k_new | v_new]
    packed = pl.pallas_call(
        kernel,
        grid=(B,),
        in_specs=in_specs,
        out_specs=pl.BlockSpec((S, pack_w), lambda b: (0, b)),
        out_shape=jax.ShapeDtypeStruct((S, B * pack_w), dtype),
        scratch_shapes=[pltpu.VMEM((S, q_sz), jnp.bfloat16)],      # ctx scratch
        compiler_params=pltpu.CompilerParams(
            dimension_semantics=("parallel",)),
    )(*operands)

    # no output transposes: only free reshapes + contiguous lane slices
    packed = packed.reshape(S, B, pack_w)
    output = packed[:, :, :H]                                      # [S, B, H]

    kv_cache_out = None
    if use_cache:
        k_new = packed[:, :, H:H + kv_w].reshape(S, B, G, HD)
        v_new = packed[:, :, H + kv_w:].reshape(S, B, G, HD)
        if has_cache:
            k_new = jnp.concatenate([kv_cache[0], k_new], axis=0)
            v_new = jnp.concatenate([kv_cache[1], v_new], axis=0)
        kv_cache_out = (k_new, v_new)
    return output, kv_cache_out


# ----------------------------------------------------------------------------
# Main
# ----------------------------------------------------------------------------
if __name__ == "__main__":
    SEQ, BATCH = 16, 2
    HIDDEN = 64
    NUM_HEADS = 4
    HEAD_DIM = 16                       # kv_channels
    GROUPS = 2                          # multi_query_group_num
    PROJ = NUM_HEADS * HEAD_DIM         # 64
    QKV_HIDDEN = PROJ + 2 * GROUPS * HEAD_DIM   # 128

    key = jax.random.PRNGKey(0)
    k_x, k_wqkv, k_bqkv, k_wd = jax.random.split(key, 4)

    hidden_states = jax.random.normal(k_x, (SEQ, BATCH, HIDDEN), jnp.float32)

    # rotary cache [S, 1, HEAD_DIM // 4, 2]  (rot_dim = HEAD_DIM // 2)
    rot_dim = HEAD_DIM // 2
    inv_freq = 1.0 / (10000.0 ** (jnp.arange(0, rot_dim, 2, jnp.float32) / rot_dim))
    freqs = jnp.arange(SEQ, dtype=jnp.float32)[:, None] * inv_freq[None, :]
    rotary_pos_emb = jnp.stack([jnp.cos(freqs), jnp.sin(freqs)], axis=-1)[:, None]

    # deterministic synthetic parameters (weights stored as [in, out])
    params = {
        "num_heads": NUM_HEADS,
        "num_groups": GROUPS,
        "head_dim": HEAD_DIM,
        "w_qkv": 0.02 * jax.random.normal(k_wqkv, (HIDDEN, QKV_HIDDEN), jnp.float32),
        "b_qkv": 0.02 * jax.random.normal(k_bqkv, (QKV_HIDDEN,), jnp.float32),
        "w_dense": 0.02 * jax.random.normal(k_wd, (PROJ, HIDDEN), jnp.float32),
        # no b_dense: add_bias_linear=False -> dense projection has no bias
    }

    # Purely-causal masking: generated in-kernel (no [B,S,S] mask DMA).
    out, kv_cache = self_attention_forward(
        hidden_states, None, rotary_pos_emb, params,
        kv_cache=None, use_cache=True, is_causal=True)

    jax.block_until_ready(out)
    jax.block_until_ready(kv_cache[0])
    jax.block_until_ready(kv_cache[1])
    assert out.shape == (SEQ, BATCH, HIDDEN)
    assert kv_cache[0].shape == (SEQ, BATCH, GROUPS, HEAD_DIM)
    assert kv_cache[1].shape == (SEQ, BATCH, GROUPS, HEAD_DIM)
    print("KERNEL_OK")
</pallas_src>

<mosaic_0001>
module attributes {stable_mosaic.version = 11 : i64} {
  func.func @kernel(%arg0: i32, %arg1: memref<1x16x64xf32, #tpu.memory_space<vmem>>, %arg2: memref<64x128xbf16, #tpu.memory_space<vmem>>, %arg3: memref<1x128xf32, #tpu.memory_space<vmem>>, %arg4: memref<16x128xf32, #tpu.memory_space<vmem>>, %arg5: memref<16x128xf32, #tpu.memory_space<vmem>>, %arg6: memref<16x128xf32, #tpu.memory_space<vmem>>, %arg7: memref<64x64xbf16, #tpu.memory_space<vmem>>, %arg8: memref<16x128xf32, #tpu.memory_space<vmem>>, %arg9: memref<16x64xbf16, #tpu.memory_space<vmem>>) attributes {dimension_semantics = [#tpu.dimension_semantics<parallel>], iteration_bounds = array<i64: 2>, scalar_prefetch = 0 : i64, scratch_operands = 1 : i64, tpu.core_type = #tpu.core_type<tc>, window_params = [{transform_indices = @transform_0, window_bounds = array<i64: 1, 16, 64>}, {pipeline_mode = #tpu.pipeline_mode<synchronous>, transform_indices = @transform_1, window_bounds = array<i64: 64, 128>}, {pipeline_mode = #tpu.pipeline_mode<synchronous>, transform_indices = @transform_2, window_bounds = array<i64: 1, 128>}, {pipeline_mode = #tpu.pipeline_mode<synchronous>, transform_indices = @transform_3, window_bounds = array<i64: 16, 128>}, {pipeline_mode = #tpu.pipeline_mode<synchronous>, transform_indices = @transform_4, window_bounds = array<i64: 16, 128>}, {pipeline_mode = #tpu.pipeline_mode<synchronous>, transform_indices = @transform_5, window_bounds = array<i64: 16, 128>}, {pipeline_mode = #tpu.pipeline_mode<synchronous>, transform_indices = @transform_6, window_bounds = array<i64: 64, 64>}, {transform_indices = @transform_7, window_bounds = array<i64: 16, 128>}]} {
    %c0 = arith.constant 0 : index
    %c0_0 = arith.constant 0 : index
    %c0_1 = arith.constant 0 : index
    %0 = vector.load %arg1[%c0, %c0_0, %c0_1] : memref<1x16x64xf32, #tpu.memory_space<vmem>>, vector<1x16x64xf32>
    %1 = vector.shape_cast %0 : vector<1x16x64xf32> to vector<16x64xf32>
    %2 = arith.truncf %1 : vector<16x64xf32> to vector<16x64xbf16>
    %c0_2 = arith.constant 0 : index
    %c0_3 = arith.constant 0 : index
    %3 = vector.load %arg2[%c0_2, %c0_3] : memref<64x128xbf16, #tpu.memory_space<vmem>>, vector<64x128xbf16>
    %cst = arith.constant dense<0.000000e+00> : vector<16x128xf32>
    %4 = tpu.matmul %2, %3, %cst {dimension_numbers = #tpu.dot_dimension_numbers<[1], [0], [0], [1], [0, 0, 1, 1], [], []>} : vector<16x64xbf16>, vector<64x128xbf16>, vector<16x128xf32> -> vector<16x128xf32>
    %c0_4 = arith.constant 0 : index
    %c0_5 = arith.constant 0 : index
    %5 = vector.load %arg3[%c0_4, %c0_5] : memref<1x128xf32, #tpu.memory_space<vmem>>, vector<1x128xf32>
    %6 = vector.broadcast %5 : vector<1x128xf32> to vector<16x128xf32>
    %7 = arith.addf %4, %6 : vector<16x128xf32>
    %c127_i32 = arith.constant 127 : i32
    %8 = tpu.dynamic_rotate %7 by %c127_i32 dim 1 : vector<16x128xf32>, i32 -> vector<16x128xf32>
    %c1_i32 = arith.constant 1 : i32
    %9 = tpu.dynamic_rotate %7 by %c1_i32 dim 1 : vector<16x128xf32>, i32 -> vector<16x128xf32>
    %c0_6 = arith.constant 0 : index
    %c0_7 = arith.constant 0 : index
    %10 = vector.load %arg4[%c0_6, %c0_7] : memref<16x128xf32, #tpu.memory_space<vmem>>, vector<16x128xf32>
    %11 = arith.mulf %7, %10 : vector<16x128xf32>
    %c0_8 = arith.constant 0 : index
    %c0_9 = arith.constant 0 : index
    %12 = vector.load %arg5[%c0_8, %c0_9] : memref<16x128xf32, #tpu.memory_space<vmem>>, vector<16x128xf32>
    %13 = arith.mulf %8, %12 : vector<16x128xf32>
    %14 = arith.addf %11, %13 : vector<16x128xf32>
    %c0_10 = arith.constant 0 : index
    %c0_11 = arith.constant 0 : index
    %15 = vector.load %arg6[%c0_10, %c0_11] : memref<16x128xf32, #tpu.memory_space<vmem>>, vector<16x128xf32>
    %16 = arith.mulf %9, %15 : vector<16x128xf32>
    %17 = arith.addf %14, %16 : vector<16x128xf32>
    %18 = vector.extract_strided_slice %17 {offsets = [0, 64], sizes = [16, 64], strides = [1, 1]} : vector<16x128xf32> to vector<16x64xf32>
    %c0_12 = arith.constant 0 : index
    %c64 = arith.constant 64 : index
    %19 = vector.load %arg8[%c0_12, %c64] : memref<16x128xf32, #tpu.memory_space<vmem>>, vector<16x64xf32>
    tpu.vector_store %arg8[%c0_12, %c64], %18 {strides = array<i32>} : memref<16x128xf32, #tpu.memory_space<vmem>>, vector<16x64xf32>,
    %20 = vector.extract_strided_slice %17 {offsets = [0, 64], sizes = [16, 32], strides = [1, 1]} : vector<16x128xf32> to vector<16x32xf32>
    %21 = vector.extract_strided_slice %17 {offsets = [0, 96], sizes = [16, 32], strides = [1, 1]} : vector<16x128xf32> to vector<16x32xf32>
    %22 = vector.extract_strided_slice %17 {offsets = [0, 0], sizes = [16, 64], strides = [1, 1]} : vector<16x128xf32> to vector<16x64xf32>
    %23 = arith.truncf %22 : vector<16x64xf32> to vector<16x64xbf16>
    %24 = arith.truncf %20 : vector<16x32xf32> to vector<16x32xbf16>
    %25 = arith.truncf %21 : vector<16x32xf32> to vector<16x32xbf16>
    %26 = tpu.iota {dimensions = array<i32: 0>} : vector<32x16xi32>
    %c16_i32 = arith.constant 16 : i32
    %c0_i32 = arith.constant 0 : i32
    %27 = arith.cmpi eq, %c16_i32, %c0_i32 : i32
    %c1_i32_13 = arith.constant 1 : i32
    %28 = arith.select %27, %c1_i32_13, %c16_i32 : i32
    %29 = vector.broadcast %28 : i32 to vector<32x16xi32>
    %30 = arith.remsi %26, %29 : vector<32x16xi32>
    %c0_i32_14 = arith.constant 0 : i32
    %31 = vector.broadcast %c0_i32_14 : i32 to vector<32x16xi32>
    %32 = arith.cmpi ne, %30, %31 : vector<32x16xi32>
    %c0_i32_15 = arith.constant 0 : i32
    %33 = vector.broadcast %c0_i32_15 : i32 to vector<32x16xi32>
    %34 = arith.cmpi slt, %30, %33 : vector<32x16xi32>
    %c0_i32_16 = arith.constant 0 : i32
    %35 = arith.cmpi slt, %28, %c0_i32_16 : i32
    %36 = vector.broadcast %35 : i1 to vector<32x16xi1>
    %37 = vector.broadcast %36 : vector<32x16xi1> to vector<32x16xi1>
    %38 = arith.xori %34, %37 : vector<32x16xi1>
    %39 = arith.andi %38, %32 : vector<32x16xi1>
    %40 = vector.broadcast %28 : i32 to vector<32x16xi32>
    %41 = arith.addi %30, %40 : vector<32x16xi32>
    %42 = arith.select %39, %41, %30 : vector<32x16xi1>, vector<32x16xi32>
    %c0_i32_17 = arith.constant 0 : i32
    %43 = vector.broadcast %c0_i32_17 : i32 to vector<32x16xi32>
    %44 = arith.addi %42, %43 : vector<32x16xi32>
    %45 = tpu.iota {dimensions = array<i32: 1>} : vector<32x16xi32>
    %46 = arith.cmpi sge, %44, %45 : vector<32x16xi32>
    %47 = vector.extract_strided_slice %23 {offsets = [0, 0], sizes = [16, 16], strides = [1, 1]} : vector<16x64xbf16> to vector<16x16xbf16>
    %48 = vector.extract_strided_slice %23 {offsets = [0, 16], sizes = [16, 16], strides = [1, 1]} : vector<16x64xbf16> to vector<16x16xbf16>
    %49 = tpu.concatenate %47, %48 in 0 : vector<16x16xbf16>, vector<16x16xbf16> -> vector<32x16xbf16>
    %50 = vector.extract_strided_slice %24 {offsets = [0, 0], sizes = [16, 16], strides = [1, 1]} : vector<16x32xbf16> to vector<16x16xbf16>
    %51 = vector.extract_strided_slice %25 {offsets = [0, 0], sizes = [16, 16], strides = [1, 1]} : vector<16x32xbf16> to vector<16x16xbf16>
    %cst_18 = arith.constant dense<0.000000e+00> : vector<32x16xf32>
    %52 = tpu.matmul %49, %50, %cst_18 {dimension_numbers = #tpu.dot_dimension_numbers<[1], [1], [0], [0], [0, 0, 1, 0], [], []>} : vector<32x16xbf16>, vector<16x16xbf16>, vector<32x16xf32> -> vector<32x16xf32>
    %cst_19 = arith.constant -1.000000e+30 : f32
    %53 = vector.broadcast %cst_19 : f32 to vector<32x16xf32>
    %54 = arith.select %46, %52, %53 : vector<32x16xi1>, vector<32x16xf32>
    %cst_20 = arith.constant dense<0xFF800000> : vector<32xf32>
    %55 = vector.multi_reduction <maximumf>, %54, %cst_20 [1] : vector<32x16xf32> to vector<32xf32>
    %56 = vector.shape_cast %55 : vector<32xf32> to vector<32x1xf32>
    %57 = vector.broadcast %56 : vector<32x1xf32> to vector<32x16xf32>
    %58 = arith.subf %54, %57 : vector<32x16xf32>
    %59 = math.exp %58 : vector<32x16xf32>
    %cst_21 = arith.constant dense<0.000000e+00> : vector<32xf32>
    %60 = vector.multi_reduction <add>, %59, %cst_21 [1] : vector<32x16xf32> to vector<32xf32>
    %61 = vector.shape_cast %60 : vector<32xf32> to vector<32x1xf32>
    %62 = tpu.reciprocal %61 {approx = true} : vector<32x1xf32> -> vector<32x1xf32>
    %63 = vector.broadcast %62 : vector<32x1xf32> to vector<32x16xf32>
    %64 = arith.mulf %59, %63 : vector<32x16xf32>
    %65 = arith.truncf %64 : vector<32x16xf32> to vector<32x16xbf16>
    %cst_22 = arith.constant dense<0.000000e+00> : vector<32x16xf32>
    %66 = tpu.matmul %65, %51, %cst_22 {dimension_numbers = #tpu.dot_dimension_numbers<[1], [0], [0], [1], [0, 0, 1, 1], [], []>} : vector<32x16xbf16>, vector<16x16xbf16>, vector<32x16xf32> -> vector<32x16xf32>
    %67 = vector.extract_strided_slice %66 {offsets = [0, 0], sizes = [16, 16], strides = [1, 1]} : vector<32x16xf32> to vector<16x16xf32>
    %68 = arith.truncf %67 : vector<16x16xf32> to vector<16x16xbf16>
    %c0_23 = arith.constant 0 : index
    %c0_24 = arith.constant 0 : index
    %69 = vector.load %arg9[%c0_23, %c0_24] : memref<16x64xbf16, #tpu.memory_space<vmem>>, vector<16x16xbf16>
    tpu.vector_store %arg9[%c0_23, %c0_24], %68 {strides = array<i32>} : memref<16x64xbf16, #tpu.memory_space<vmem>>, vector<16x16xbf16>,
    %70 = vector.extract_strided_slice %66 {offsets = [16, 0], sizes = [16, 16], strides = [1, 1]} : vector<32x16xf32> to vector<16x16xf32>
    %71 = arith.truncf %70 : vector<16x16xf32> to vector<16x16xbf16>
    %c0_25 = arith.constant 0 : index
    %c16 = arith.constant 16 : index
    %72 = vector.load %arg9[%c0_25, %c16] : memref<16x64xbf16, #tpu.memory_space<vmem>>, vector<16x16xbf16>
    tpu.vector_store %arg9[%c0_25, %c16], %71 {strides = array<i32>} : memref<16x64xbf16, #tpu.memory_space<vmem>>, vector<16x16xbf16>,
    %73 = vector.extract_strided_slice %23 {offsets = [0, 32], sizes = [16, 16], strides = [1, 1]} : vector<16x64xbf16> to vector<16x16xbf16>
    %74 = vector.extract_strided_slice %23 {offsets = [0, 48], sizes = [16, 16], strides = [1, 1]} : vector<16x64xbf16> to vector<16x16xbf16>
    %75 = tpu.concatenate %73, %74 in 0 : vector<16x16xbf16>, vector<16x16xbf16> -> vector<32x16xbf16>
    %76 = vector.extract_strided_slice %24 {offsets = [0, 16], sizes = [16, 16], strides = [1, 1]} : vector<16x32xbf16> to vector<16x16xbf16>
    %77 = vector.extract_strided_slice %25 {offsets = [0, 16], sizes = [16, 16], strides = [1, 1]} : vector<16x32xbf16> to vector<16x16xbf16>
    %cst_26 = arith.constant dense<0.000000e+00> : vector<32x16xf32>
    %78 = tpu.matmul %75, %76, %cst_26 {dimension_numbers = #tpu.dot_dimension_numbers<[1], [1], [0], [0], [0, 0, 1, 0], [], []>} : vector<32x16xbf16>, vector<16x16xbf16>, vector<32x16xf32> -> vector<32x16xf32>
    %cst_27 = arith.constant -1.000000e+30 : f32
    %79 = vector.broadcast %cst_27 : f32 to vector<32x16xf32>
    %80 = arith.select %46, %78, %79 : vector<32x16xi1>, vector<32x16xf32>
    %cst_28 = arith.constant dense<0xFF800000> : vector<32xf32>
    %81 = vector.multi_reduction <maximumf>, %80, %cst_28 [1] : vector<32x16xf32> to vector<32xf32>
    %82 = vector.shape_cast %81 : vector<32xf32> to vector<32x1xf32>
    %83 = vector.broadcast %82 : vector<32x1xf32> to vector<32x16xf32>
    %84 = arith.subf %80, %83 : vector<32x16xf32>
    %85 = math.exp %84 : vector<32x16xf32>
    %cst_29 = arith.constant dense<0.000000e+00> : vector<32xf32>
    %86 = vector.multi_reduction <add>, %85, %cst_29 [1] : vector<32x16xf32> to vector<32xf32>
    %87 = vector.shape_cast %86 : vector<32xf32> to vector<32x1xf32>
    %88 = tpu.reciprocal %87 {approx = true} : vector<32x1xf32> -> vector<32x1xf32>
    %89 = vector.broadcast %88 : vector<32x1xf32> to vector<32x16xf32>
    %90 = arith.mulf %85, %89 : vector<32x16xf32>
    %91 = arith.truncf %90 : vector<32x16xf32> to vector<32x16xbf16>
    %cst_30 = arith.constant dense<0.000000e+00> : vector<32x16xf32>
    %92 = tpu.matmul %91, %77, %cst_30 {dimension_numbers = #tpu.dot_dimension_numbers<[1], [0], [0], [1], [0, 0, 1, 1], [], []>} : vector<32x16xbf16>, vector<16x16xbf16>, vector<32x16xf32> -> vector<32x16xf32>
    %93 = vector.extract_strided_slice %92 {offsets = [0, 0], sizes = [16, 16], strides = [1, 1]} : vector<32x16xf32> to vector<16x16xf32>
    %94 = arith.truncf %93 : vector<16x16xf32> to vector<16x16xbf16>
    %c0_31 = arith.constant 0 : index
    %c32 = arith.constant 32 : index
    %95 = vector.load %arg9[%c0_31, %c32] : memref<16x64xbf16, #tpu.memory_space<vmem>>, vector<16x16xbf16>
    tpu.vector_store %arg9[%c0_31, %c32], %94 {strides = array<i32>} : memref<16x64xbf16, #tpu.memory_space<vmem>>, vector<16x16xbf16>,
    %96 = vector.extract_strided_slice %92 {offsets = [16, 0], sizes = [16, 16], strides = [1, 1]} : vector<32x16xf32> to vector<16x16xf32>
    %97 = arith.truncf %96 : vector<16x16xf32> to vector<16x16xbf16>
    %c0_32 = arith.constant 0 : index
    %c48 = arith.constant 48 : index
    %98 = vector.load %arg9[%c0_32, %c48] : memref<16x64xbf16, #tpu.memory_space<vmem>>, vector<16x16xbf16>
    tpu.vector_store %arg9[%c0_32, %c48], %97 {strides = array<i32>} : memref<16x64xbf16, #tpu.memory_space<vmem>>, vector<16x16xbf16>,
    %c0_33 = arith.constant 0 : index
    %c0_34 = arith.constant 0 : index
    %99 = vector.load %arg9[%c0_33, %c0_34] : memref<16x64xbf16, #tpu.memory_space<vmem>>, vector<16x64xbf16>
    %c0_35 = arith.constant 0 : index
    %c0_36 = arith.constant 0 : index
    %100 = vector.load %arg7[%c0_35, %c0_36] : memref<64x64xbf16, #tpu.memory_space<vmem>>, vector<64x64xbf16>
    %cst_37 = arith.constant dense<0.000000e+00> : vector<16x64xf32>
    %101 = tpu.matmul %99, %100, %cst_37 {dimension_numbers = #tpu.dot_dimension_numbers<[1], [0], [0], [1], [0, 0, 1, 1], [], []>} : vector<16x64xbf16>, vector<64x64xbf16>, vector<16x64xf32> -> vector<16x64xf32>
    %c0_38 = arith.constant 0 : index
    %c0_39 = arith.constant 0 : index
    %102 = vector.load %arg8[%c0_38, %c0_39] : memref<16x128xf32, #tpu.memory_space<vmem>>, vector<16x64xf32>
    tpu.vector_store %arg8[%c0_38, %c0_39], %101 {strides = array<i32>} : memref<16x128xf32, #tpu.memory_space<vmem>>, vector<16x64xf32>,
    return
  }
  func.func @transform_0(%arg0: i32) -> (i32, i32, i32) {
    %c0_i32 = arith.constant 0 : i32
    %c0_i32_0 = arith.constant 0 : i32
    %c0_i32_1 = arith.constant 0 : i32
    return %arg0, %c0_i32, %c0_i32_0 : i32, i32, i32
  }
  func.func @transform_1(%arg0: i32) -> (i32, i32) {
    %c0_i32 = arith.constant 0 : i32
    %c0_i32_0 = arith.constant 0 : i32
    %c0_i32_1 = arith.constant 0 : i32
    return %c0_i32, %c0_i32_0 : i32, i32
  }
  func.func @transform_2(%arg0: i32) -> (i32, i32) {
    %c0_i32 = arith.constant 0 : i32
    %c0_i32_0 = arith.constant 0 : i32
    %c0_i32_1 = arith.constant 0 : i32
    return %c0_i32, %c0_i32_0 : i32, i32
  }
  func.func @transform_3(%arg0: i32) -> (i32, i32) {
    %c0_i32 = arith.constant 0 : i32
    %c0_i32_0 = arith.constant 0 : i32
    %c0_i32_1 = arith.constant 0 : i32
    return %c0_i32, %c0_i32_0 : i32, i32
  }
  func.func @transform_4(%arg0: i32) -> (i32, i32) {
    %c0_i32 = arith.constant 0 : i32
    %c0_i32_0 = arith.constant 0 : i32
    %c0_i32_1 = arith.constant 0 : i32
    return %c0_i32, %c0_i32_0 : i32, i32
  }
  func.func @transform_5(%arg0: i32) -> (i32, i32) {
    %c0_i32 = arith.constant 0 : i32
    %c0_i32_0 = arith.constant 0 : i32
    %c0_i32_1 = arith.constant 0 : i32
    return %c0_i32, %c0_i32_0 : i32, i32
  }
  func.func @transform_6(%arg0: i32) -> (i32, i32) {
    %c0_i32 = arith.constant 0 : i32
    %c0_i32_0 = arith.constant 0 : i32
    %c0_i32_1 = arith.constant 0 : i32
    return %c0_i32, %c0_i32_0 : i32, i32
  }
  func.func @transform_7(%arg0: i32) -> (i32, i32) {
    %c0_i32 = arith.constant 0 : i32
    %c0_i32_0 = arith.constant 0 : i32
    return %c0_i32, %arg0 : i32, i32
  }
}

</mosaic_0001>

<llo_original>
// kernel: tpu_custom_call.1
$region0: #{tpu_custom_call.1}
  #allocation0 [shape = 'u32[]', space=smem, size = 0x4, offset = 0x4, fixed_abs, tag = 'smem constant byte address 0x4 - core index']
  #allocation1 [shape = 'u32[144,128]{1,0:T(1,128)}', space=vmem, size = 0x12000, scoped, tag = 'internal scratch']
  #allocation2 [shape = 'bf16[16,64]{1,0:T(16,128)(2,1)}', space=vmem, size = 0x1000, scoped, tag = 'scratch operand']
  %s0 = inlined_call_operand.hbm [shape: f32[2,16,64], index: 0, kind: input, shape index: {}]
  %s1 = inlined_call_operand.hbm [shape: bf16[64,128], index: 1, kind: input, shape index: {}]
  %s2 = inlined_call_operand.vmem [shape: f32[1,128], index: 2, kind: input, shape index: {}]
  %s3 = inlined_call_operand.hbm [shape: f32[16,128], index: 3, kind: input, shape index: {}]
  %s4 = inlined_call_operand.hbm [shape: f32[16,128], index: 4, kind: input, shape index: {}]
  %s5 = inlined_call_operand.vmem [shape: f32[16,128], index: 5, kind: input, shape index: {}]
  %s6 = inlined_call_operand.hbm [shape: bf16[64,64], index: 6, kind: input, shape index: {}]
  %s7 = inlined_call_operand.hbm [shape: f32[16,256], index: 7, kind: output, shape index: {}]
  %s8 = sld [smem:[#allocation0]]
  $region81: #{tpu_custom_call.1} parent=0
    _
  %s10 = ssub.s32 1, %s8
  %s11 = scalar_select 0, %s10, %s8
  $region1: #{tpu_custom_call.1} parent=0
    #allocation3 [shape = 'u8[16384]{0}', space=vmem, size = 0x4000, scoped, tag = 'input window, operand 0']
    #allocation4 [shape = 's32[2]{0}', space=sflag, size = 0x8, scoped, tag = 'scoped memory for tpu_custom_call.1']
    #allocation5 [shape = 's32[2]{0}', space=sflag, size = 0x8, scoped, tag = 'scoped memory for tpu_custom_call.1']
    #allocation6 [shape = 'u8[16384]{0}', space=vmem, size = 0x4000, scoped, tag = 'input window, operand 1, single buffered']
    #allocation7 [shape = 's32[1]{0}', space=sflag, size = 0x4, scoped, tag = 'scoped memory for tpu_custom_call.1']
    #allocation8 [shape = 'u8[8192]{0}', space=vmem, size = 0x2000, scoped, tag = 'input window, operand 3, single buffered']
    #allocation9 [shape = 'u8[8192]{0}', space=vmem, size = 0x2000, scoped, tag = 'input window, operand 4, single buffered']
    #allocation10 [shape = 's32[1]{0}', space=sflag, size = 0x4, scoped, tag = 'scoped memory for tpu_custom_call.1']
    #allocation11 [shape = 'u8[16384]{0}', space=vmem, size = 0x4000, scoped, tag = 'input window, operand 6, single buffered']
    #allocation12 [shape = 'u8[16384]{0}', space=vmem, size = 0x4000, scoped, tag = 'output window, operand 0']
    %12 = vsyncpa [#allocation4], 0
    %s13 = scalar_lea.sflag [#allocation4], 1
    %14 = vsyncpa %s13, 0
    %15 = vsyncpa [#allocation7], 0
    %16 = vsyncpa [#allocation10], 0
    %17 = vsyncpa [#allocation5], 0
    %s18 = scalar_lea.sflag [#allocation5], 1
    %19 = vsyncpa %s18, 0
    loop: start=0, step=1, limit=4
    $region2: #{tpu_custom_call.1} parent=1 // loop_pre_header
      _
    $region3: #{tpu_custom_call.1} parent=1 // loop_header
      %s21 = sphi 0, %s25
      %p22 = scmp.ge.s32.totalorder %s21, 4
      %s31 = sphi 0, %s33
      %s34 = sphi 0, %s31
      %s35 = sphi 0, %s34
      %s51 = sphi 0, %s35
      %s55 = sphi 0, %s55
      %s57 = sphi 0, %s55
      %s58 = sphi 0, %s57
      %s72 = sphi 0, %s58
      %s76 = sphi 0, %s76
      %s78 = sphi 0, %s76
      %s79 = sphi 0, %s78
      %s93 = sphi 0, %s79
      %s97 = sphi 0, %s97
      %s99 = sphi 0, %s97
      %s100 = sphi 0, %s99
      %s114 = sphi 0, %s100
      %s118 = sphi 0, %s118
      %s120 = sphi 0, %s118
      %s121 = sphi 0, %s120
      %s135 = sphi 0, %s121
      %s139 = sphi 0, %s139
      %s141 = sphi 0, %s139
      %s142 = sphi 0, %s141
      %s156 = sphi 0, %s142
      %s160 = sphi 0, %s160
      %s162 = sphi 0, %s160
      %s163 = sphi 0, %s162
      %s177 = sphi 0, %s163
      %s183 = sphi 0, %s185
      %s186 = sphi 0, %s183
      %s187 = sphi 0, %s186
      %s203 = sphi 0, %s187
    $region4: #{tpu_custom_call.1} parent=1 // loop_header_branch
      %24 = sbr.rel (%p22) target = $region8
    $region5: #{tpu_custom_call.1} parent=1 // loop_body
      %s26 = ssub.s32 %s21, 1
      %s27 = ssub.s32 %s21, 2
      %s28 = sadd.s32 %s21, 1
      %s29 = ssub.s32 %s21, %s28
      %p30 = scmp.eq.s32.totalorder %s29, 0
      %s32 = sadd.s32 %s31, 1
      %s33 = scalar_select %p30, %s31, %s32
      %p36 = pneg %p30
      %p37 = scmp.eq.s32.totalorder %s21, 1
      %p38 = por %p36, %p37
      %p39 = scmp.ne.s32.totalorder %s31, %s34
      %p40 = scmp.eq.s32.totalorder %s21, 0
      %p41 = por %p39, %p40
      %p42 = scmp.ne.s32.totalorder %s31, %s34
      %p43 = scmp.eq.s32.totalorder %s26, 1
      %p44 = por %p42, %p43
      %p45 = scmp.ne.s32.totalorder %s34, %s35
      %p46 = scmp.eq.s32.totalorder %s26, 0
      %p47 = por %p45, %p46
      %p48 = scmp.ne.s32.totalorder %s34, %s35
      %p49 = scmp.eq.s32.totalorder %s27, 1
      %p50 = por %p48, %p49
      %p52 = scmp.ne.s32.totalorder %s35, %s51
      %p53 = scmp.eq.s32.totalorder %s27, 0
      %p54 = por %p52, %p53
      %s56 = sadd.s32 %s55, 1
      %p59 = scmp.eq.s32.totalorder %s21, 1
      %p60 = scmp.ne.s32.totalorder %s55, %s57
      %p61 = scmp.eq.s32.totalorder %s21, 0
      %p62 = por %p60, %p61
      %p63 = scmp.ne.s32.totalorder %s55, %s57
      %p64 = scmp.eq.s32.totalorder %s26, 1
      %p65 = por %p63, %p64
      %p66 = scmp.ne.s32.totalorder %s57, %s58
      %p67 = scmp.eq.s32.totalorder %s26, 0
      %p68 = por %p66, %p67
      %p69 = scmp.ne.s32.totalorder %s57, %s58
      %p70 = scmp.eq.s32.totalorder %s27, 1
      %p71 = por %p69, %p70
      %p73 = scmp.ne.s32.totalorder %s58, %s72
      %p74 = scmp.eq.s32.totalorder %s27, 0
      %p75 = por %p73, %p74
      %s77 = sadd.s32 %s76, 1
      %p80 = scmp.eq.s32.totalorder %s21, 1
      %p81 = scmp.ne.s32.totalorder %s76, %s78
      %p82 = scmp.eq.s32.totalorder %s21, 0
      %p83 = por %p81, %p82
      %p84 = scmp.ne.s32.totalorder %s76, %s78
      %p85 = scmp.eq.s32.totalorder %s26, 1
      %p86 = por %p84, %p85
      %p87 = scmp.ne.s32.totalorder %s78, %s79
      %p88 = scmp.eq.s32.totalorder %s26, 0
      %p89 = por %p87, %p88
      %p90 = scmp.ne.s32.totalorder %s78, %s79
      %p91 = scmp.eq.s32.totalorder %s27, 1
      %p92 = por %p90, %p91
      %p94 = scmp.ne.s32.totalorder %s79, %s93
      %p95 = scmp.eq.s32.totalorder %s27, 0
      %p96 = por %p94, %p95
      %s98 = sadd.s32 %s97, 1
      %p101 = scmp.eq.s32.totalorder %s21, 1
      %p102 = scmp.ne.s32.totalorder %s97, %s99
      %p103 = scmp.eq.s32.totalorder %s21, 0
      %p104 = por %p102, %p103
      %p105 = scmp.ne.s32.totalorder %s97, %s99
      %p106 = scmp.eq.s32.totalorder %s26, 1
      %p107 = por %p105, %p106
      %p108 = scmp.ne.s32.totalorder %s99, %s100
      %p109 = scmp.eq.s32.totalorder %s26, 0
      %p110 = por %p108, %p109
      %p111 = scmp.ne.s32.totalorder %s99, %s100
      %p112 = scmp.eq.s32.totalorder %s27, 1
      %p113 = por %p111, %p112
      %p115 = scmp.ne.s32.totalorder %s100, %s114
      %p116 = scmp.eq.s32.totalorder %s27, 0
      %p117 = por %p115, %p116
      %s119 = sadd.s32 %s118, 1
      %p122 = scmp.eq.s32.totalorder %s21, 1
      %p123 = scmp.ne.s32.totalorder %s118, %s120
      %p124 = scmp.eq.s32.totalorder %s21, 0
      %p125 = por %p123, %p124
      %p126 = scmp.ne.s32.totalorder %s118, %s120
      %p127 = scmp.eq.s32.totalorder %s26, 1
      %p128 = por %p126, %p127
      %p129 = scmp.ne.s32.totalorder %s120, %s121
      %p130 = scmp.eq.s32.totalorder %s26, 0
      %p131 = por %p129, %p130
      %p132 = scmp.ne.s32.totalorder %s120, %s121
      %p133 = scmp.eq.s32.totalorder %s27, 1
      %p134 = por %p132, %p133
      %p136 = scmp.ne.s32.totalorder %s121, %s135
      %p137 = scmp.eq.s32.totalorder %s27, 0
      %p138 = por %p136, %p137
      %s140 = sadd.s32 %s139, 1
      %p143 = scmp.eq.s32.totalorder %s21, 1
      %p144 = scmp.ne.s32.totalorder %s139, %s141
      %p145 = scmp.eq.s32.totalorder %s21, 0
      %p146 = por %p144, %p145
      %p147 = scmp.ne.s32.totalorder %s139, %s141
      %p148 = scmp.eq.s32.totalorder %s26, 1
      %p149 = por %p147, %p148
      %p150 = scmp.ne.s32.totalorder %s141, %s142
      %p151 = scmp.eq.s32.totalorder %s26, 0
      %p152 = por %p150, %p151
      %p153 = scmp.ne.s32.totalorder %s141, %s142
      %p154 = scmp.eq.s32.totalorder %s27, 1
      %p155 = por %p153, %p154
      %p157 = scmp.ne.s32.totalorder %s142, %s156
      %p158 = scmp.eq.s32.totalorder %s27, 0
      %p159 = por %p157, %p158
      %s161 = sadd.s32 %s160, 1
      %p164 = scmp.eq.s32.totalorder %s21, 1
      %p165 = scmp.ne.s32.totalorder %s160, %s162
      %p166 = scmp.eq.s32.totalorder %s21, 0
      %p167 = por %p165, %p166
      %p168 = scmp.ne.s32.totalorder %s160, %s162
      %p169 = scmp.eq.s32.totalorder %s26, 1
      %p170 = por %p168, %p169
      %p171 = scmp.ne.s32.totalorder %s162, %s163
      %p172 = scmp.eq.s32.totalorder %s26, 0
      %p173 = por %p171, %p172
      %p174 = scmp.ne.s32.totalorder %s162, %s163
      %p175 = scmp.eq.s32.totalorder %s27, 1
      %p176 = por %p174, %p175
      %p178 = scmp.ne.s32.totalorder %s163, %s177
      %p179 = scmp.eq.s32.totalorder %s27, 0
      %p180 = por %p178, %p179
      %s181 = ssub.s32 %s21, %s28
      %p182 = scmp.eq.s32.totalorder %s181, 0
      %s184 = sadd.s32 %s183, 1
      %s185 = scalar_select %p182, %s183, %s184
      %p188 = pneg %p182
      %p189 = scmp.eq.s32.totalorder %s21, 1
      %p190 = por %p188, %p189
      %p191 = scmp.ne.s32.totalorder %s183, %s186
      %p192 = scmp.eq.s32.totalorder %s21, 0
      %p193 = por %p191, %p192
      %p194 = scmp.ne.s32.totalorder %s183, %s186
      %p195 = scmp.eq.s32.totalorder %s26, 1
      %p196 = por %p194, %p195
      %p197 = scmp.ne.s32.totalorder %s186, %s187
      %p198 = scmp.eq.s32.totalorder %s26, 0
      %p199 = por %p197, %p198
      %p200 = scmp.ne.s32.totalorder %s186, %s187
      %p201 = scmp.eq.s32.totalorder %s27, 1
      %p202 = por %p200, %p201
      %p204 = scmp.ne.s32.totalorder %s187, %s203
      %p205 = scmp.eq.s32.totalorder %s27, 0
      %p206 = por %p204, %p205
      %p207 = scmp.le.s32.totalorder 1, %s21
      %p208 = scmp.lt.s32.totalorder %s21, 3
      %p209 = pnand %p207, %p208
      %p210 = pneg %p209
      // Predicated region
      $region9: #{tpu_custom_call.1} parent=5 // pred_check
        _
      $region10: #{tpu_custom_call.1} parent=5 // pred_check_branch
        %212 = sbr.rel (%p209) target = $region12
      $region11: #{tpu_custom_call.1} parent=5 // pred_region
        %s213 = ssub.s32 %s21, 1
        // Predicated region
        $region13: #{tpu_custom_call.1} parent=11 // pred_check
          %p214 = pneg %p68
        $region14: #{tpu_custom_call.1} parent=11 // pred_check_branch
          %216 = sbr.rel (%p214) target = $region16
        $region15: #{tpu_custom_call.1} parent=11 // pred_region
          %s218 = ssub.s32 512, 512
          %219 = vsyncadd [#allocation7], %s218
          %s220 = sshll.u32 [#allocation6], 4
          %s221 = int_to_ptr.vmem [resolvable:$true] %s220
          %226 = dma.hbm_to_vmem [thread:$0]  %s1, 512, %s221, [#allocation7], 64, 64, 4
        $region16: #{tpu_custom_call.1} parent=11 // pred_fallthru
          _
        // Predicated region
        $region17: #{tpu_custom_call.1} parent=11 // pred_check
          %p227 = pneg %p89
        $region18: #{tpu_custom_call.1} parent=11 // pred_check_branch
          %229 = sbr.rel (%p227) target = $region20
        $region19: #{tpu_custom_call.1} parent=11 // pred_region
          _
        $region20: #{tpu_custom_call.1} parent=11 // pred_fallthru
          _
        // Predicated region
        $region21: #{tpu_custom_call.1} parent=11 // pred_check
          %p230 = pneg %p110
        $region22: #{tpu_custom_call.1} parent=11 // pred_check_branch
          %232 = sbr.rel (%p230) target = $region24
        $region23: #{tpu_custom_call.1} parent=11 // pred_region
          %s234 = ssub.s32 256, 256
          %235 = vsyncadd [#allocation7], %s234
          %s236 = sshll.u32 [#allocation8], 4
          %s237 = int_to_ptr.vmem [resolvable:$true] %s236
          %242 = dma.hbm_to_vmem [thread:$0]  %s3, 256, %s237, [#allocation7], 128, 128, 8
        $region24: #{tpu_custom_call.1} parent=11 // pred_fallthru
          _
        // Predicated region
        $region25: #{tpu_custom_call.1} parent=11 // pred_check
          %p243 = pneg %p131
        $region26: #{tpu_custom_call.1} parent=11 // pred_check_branch
          %245 = sbr.rel (%p243) target = $region28
        $region27: #{tpu_custom_call.1} parent=11 // pred_region
          %s247 = ssub.s32 256, 256
          %248 = vsyncadd [#allocation10], %s247
          %s249 = sshll.u32 [#allocation9], 4
          %s250 = int_to_ptr.vmem [resolvable:$true] %s249
          %255 = dma.hbm_to_vmem [thread:$0]  %s4, 256, %s250, [#allocation10], 128, 128, 8
        $region28: #{tpu_custom_call.1} parent=11 // pred_fallthru
          _
        // Predicated region
        $region29: #{tpu_custom_call.1} parent=11 // pred_check
          %p256 = pneg %p152
        $region30: #{tpu_custom_call.1} parent=11 // pred_check_branch
          %258 = sbr.rel (%p256) target = $region32
        $region31: #{tpu_custom_call.1} parent=11 // pred_region
          _
        $region32: #{tpu_custom_call.1} parent=11 // pred_fallthru
          _
        // Predicated region
        $region33: #{tpu_custom_call.1} parent=11 // pred_check
          %p259 = pneg %p173
        $region34: #{tpu_custom_call.1} parent=11 // pred_check_branch
          %261 = sbr.rel (%p259) target = $region36
        $region35: #{tpu_custom_call.1} parent=11 // pred_region
          %s263 = ssub.s32 512, 512
          %264 = vsyncadd [#allocation10], %s263
          %s265 = sshll.u32 [#allocation11], 4
          %s266 = int_to_ptr.vmem [resolvable:$true] %s265
          %271 = dma.hbm_to_vmem [thread:$0]  %s6, 512, %s266, [#allocation10], 64, 64, 4
        $region36: #{tpu_custom_call.1} parent=11 // pred_fallthru
          _
      $region12: #{tpu_custom_call.1} parent=5 // pred_fallthru
        _
      %p272 = scmp.lt.s32.totalorder %s21, 2
      // Predicated region
      $region37: #{tpu_custom_call.1} parent=5 // pred_check
        %p273 = pneg %p272
      $region38: #{tpu_custom_call.1} parent=5 // pred_check_branch
        %275 = sbr.rel (%p273) target = $region40
      $region39: #{tpu_custom_call.1} parent=5 // pred_region
        // Predicated region
        $region41: #{tpu_custom_call.1} parent=39 // pred_check
          %p276 = pneg %p41
        $region42: #{tpu_custom_call.1} parent=39 // pred_check_branch
          %278 = sbr.rel (%p276) target = $region44
        $region43: #{tpu_custom_call.1} parent=39 // pred_region
          %s279 = sand.u32 %s31, 1
          %s280 = scalar_lea.sflag [#allocation4], %s279
          %s281 = sand.u32 %s31, 1
          %s282 = smul.addr %s281, 16
          %s283 = scalar_lea.vmem [#allocation3], %s282
          %s285 = ssub.s32 256, 256
          %286 = vsyncadd %s280, %s285
          %s287 = smul.addr %s21, 2
          %s288 = smul.addr %s287, 128
          %s289 = scalar_lea.hbm %s0, %s288
          %s290 = sshll.u32 %s283, 4
          %s291 = int_to_ptr.vmem [resolvable:$true] %s290
          %296 = dma.hbm_to_vmem [thread:$0]  %s289, 256, %s291, %s280, 128, 128, 8
        $region44: #{tpu_custom_call.1} parent=39 // pred_fallthru
          _
      $region40: #{tpu_custom_call.1} parent=5 // pred_fallthru
        _
      %p297 = scmp.le.s32.totalorder 1, %s21
      %p298 = scmp.lt.s32.totalorder %s21, 3
      %p299 = pnand %p297, %p298
      %p300 = pneg %p299
      // Predicated region
      $region45: #{tpu_custom_call.1} parent=5 // pred_check
        _
      $region46: #{tpu_custom_call.1} parent=5 // pred_check_branch
        %302 = sbr.rel (%p299) target = $region48
      $region47: #{tpu_custom_call.1} parent=5 // pred_region
        %s303 = ssub.s32 %s21, 1
        %s304 = sand.u32 %s34, 1
        %s305 = scalar_lea.sflag [#allocation4], %s304
        %s306 = sand.u32 %s34, 1
        %s307 = smul.addr %s306, 16
        %s308 = scalar_lea.vmem [#allocation3], %s307
        // Predicated region
        $region49: #{tpu_custom_call.1} parent=47 // pred_check
          %p309 = pneg %p47
        $region50: #{tpu_custom_call.1} parent=47 // pred_check_branch
          %311 = sbr.rel (%p309) target = $region52
        $region51: #{tpu_custom_call.1} parent=47 // pred_region
          %312 = dma.done %s305, 256
        $region52: #{tpu_custom_call.1} parent=47 // pred_fallthru
          _
        // Predicated region
        $region53: #{tpu_custom_call.1} parent=47 // pred_check
          %p313 = pneg %p68
        $region54: #{tpu_custom_call.1} parent=47 // pred_check_branch
          %315 = sbr.rel (%p313) target = $region56
        $region55: #{tpu_custom_call.1} parent=47 // pred_region
          %316 = dma.done [#allocation7], 512
        $region56: #{tpu_custom_call.1} parent=47 // pred_fallthru
          _
        // Predicated region
        $region57: #{tpu_custom_call.1} parent=47 // pred_check
          %p317 = pneg %p110
        $region58: #{tpu_custom_call.1} parent=47 // pred_check_branch
          %319 = sbr.rel (%p317) target = $region60
        $region59: #{tpu_custom_call.1} parent=47 // pred_region
          %320 = dma.done [#allocation7], 256
        $region60: #{tpu_custom_call.1} parent=47 // pred_fallthru
          _
        // Predicated region
        $region61: #{tpu_custom_call.1} parent=47 // pred_check
          %p321 = pneg %p131
        $region62: #{tpu_custom_call.1} parent=47 // pred_check_branch
          %323 = sbr.rel (%p321) target = $region64
        $region63: #{tpu_custom_call.1} parent=47 // pred_region
          %324 = dma.done [#allocation10], 256
        $region64: #{tpu_custom_call.1} parent=47 // pred_fallthru
          _
        // Predicated region
        $region65: #{tpu_custom_call.1} parent=47 // pred_check
          %p325 = pneg %p173
        $region66: #{tpu_custom_call.1} parent=47 // pred_check_branch
          %327 = sbr.rel (%p325) target = $region68
        $region67: #{tpu_custom_call.1} parent=47 // pred_region
          %328 = dma.done [#allocation10], 512
        $region68: #{tpu_custom_call.1} parent=47 // pred_fallthru
          _
        %s329 = sand.u32 %s34, 1
        %s330 = scalar_lea.sflag [#allocation4], %s329
        %s331 = sand.u32 %s34, 1
        %s332 = smul.addr %s331, 16
        %s333 = scalar_lea.vmem [#allocation3], %s332
        %p334 = pneg %p47
        %p335 = pneg %p44
        %p336 = pneg %p68
        %p337 = pneg %p65
        %p338 = pneg %p89
        %p339 = pneg %p86
        %p340 = pneg %p110
        %p341 = pneg %p107
        %p342 = pneg %p131
        %p343 = pneg %p128
        %p344 = pneg %p152
        %p345 = pneg %p149
        %p346 = pneg %p173
        %p347 = pneg %p170
        %p348 = pneg %p199
        %p349 = pneg %p196
        %s350 = sand.u32 %s186, 1
        %s351 = scalar_lea.sflag [#allocation5], %s350
        %s352 = sand.u32 %s186, 1
        %s353 = smul.addr %s352, 16
        %s354 = scalar_lea.vmem [#allocation12], %s353
        %v356 = vld [vmem:[%s308] sm:$0xff]
        %v357 = vld [vmem:[%s308 + $0x8] sm:$0xff]
        %v358 = vpack.c.bf16 %v357, %v356
        %v359 = vld [vmem:[#allocation6] sm:$0xf]
        %v360 = vld [vmem:[#allocation6 + $0x4] sm:$0xf]
        %v361 = vld [vmem:[#allocation6 + $0x8] sm:$0xf]
        %v362 = vld [vmem:[#allocation6 + $0xc] sm:$0xf]
        %v363 = vld [vmem:[#allocation6 + $0x10] sm:$0xf]
        %v364 = vld [vmem:[#allocation6 + $0x14] sm:$0xf]
        %v365 = vld [vmem:[#allocation6 + $0x18] sm:$0xf]
        %v366 = vld [vmem:[#allocation6 + $0x1c] sm:$0xf]
        %v367 = vld [vmem:[%s2] sm:$0x1]
        %v369 = vlaneseq
        %v370 = vshrl.u32 %v369, 7
        %v371 = vsub.s32 0, %v370
        %v372 = vrot.slane %v367, %v371
        %v382 = vunpack.c.l.b16 %v359
        %v383 = vunpack.c.l.b16 %v360
        %v384 = vunpack.c.l.b16 %v361
        %v385 = vunpack.c.l.b16 %v362
        %v386 = vunpack.c.l.b16 %v363
        %v387 = vunpack.c.l.b16 %v364
        %v388 = vunpack.c.l.b16 %v365
        %v389 = vunpack.c.l.b16 %v366
        %v390 = vpack.c.b16 %v383, %v382
        %v391 = vpack.c.b16 %v385, %v384
        %v392 = vpack.c.b16 %v387, %v386
        %v393 = vpack.c.b16 %v389, %v388
        %vm398 = vcmask 523264
        %v400 = vsel %vm398, %v358, 0
        %402 = vmatprep.subr.bf16.mxu0 0
        %403 = vmatpush1.bf16.msra.mxu0 %v390
        %404 = vmatprep.subr.bf16.mxu0 0
        %405 = vmatpush1.bf16.msra.mxu0 %v391
        %406 = vmatprep.subr.bf16.mxu0 0
        %407 = vmatpush1.bf16.msra.mxu0 %v392
        %408 = vmatprep.subr.bf16.mxu0 0
        %409 = vmatpush1.bf16.msra.mxu0 %v393
        %410 = vmatprep.subr.bf16.mxu0 0
        %411 = vmatpush1.bf16.msra.mxu0 0
        %412 = vmatprep.subr.bf16.mxu0 0
        %413 = vmatpush1.bf16.msra.mxu0 0
        %414 = vmatprep.subr.bf16.mxu0 0
        %415 = vmatpush1.bf16.msra.mxu0 0
        %416 = vmatprep.subr.bf16.mxu0 0
        %417 = vmatpush1.bf16.msra.mxu0 0
        %418 = vmatprep.subr.bf16.mxu0 0
        %419 = vmatpush1.bf16.msra.mxu0 0
        %420 = vmatprep.subr.bf16.mxu0 0
        %421 = vmatpush1.bf16.msra.mxu0 0
        %422 = vmatprep.subr.bf16.mxu0 0
        %423 = vmatpush1.bf16.msra.mxu0 0
        %424 = vmatprep.subr.bf16.mxu0 0
        %425 = vmatpush1.bf16.msra.mxu0 0
        %426 = vmatprep.subr.bf16.mxu0 0
        %427 = vmatpush1.bf16.msra.mxu0 0
        %428 = vmatprep.subr.bf16.mxu0 0
        %429 = vmatpush1.bf16.msra.mxu0 0
        %430 = vmatprep.subr.bf16.mxu0 0
        %431 = vmatpush1.bf16.msra.mxu0 0
        %432 = vmatprep.subr.bf16.mxu0 0
        %433 = vmatpush1.bf16.msra.mxu0 0
        %434 = vmatprep.mubr.bf16.mxu0 0
        %435 = vmatmul.mubr.bf16.gmra.mrb[0].mxu0 %v400
        %v436 = vpop.f32.mrb[0].mxu0
        %v437 = vadd.f32 %v372, %v436
        %v438 = vpop.f32.mrb[0].mxu0
        %v439 = vpop.f32.mrb[0].mxu0
        %v440 = vadd.f32 %v372, %v439
        %v441 = vpop.f32.mrb[0].mxu0
        %442 = vdwg.mxu0
        %443 = vrot.lane.b32.xlu0 %v437, 127
        %v444 = vpop.permute.xlu0 %443
        %445 = vrot.lane.b32.xlu0 %v440, 127
        %v446 = vpop.permute.xlu0 %445
        %447 = vrot.lane.b32.xlu0 %v437, 1
        %v448 = vpop.permute.xlu0 %447
        %449 = vrot.lane.b32.xlu0 %v440, 1
        %v450 = vpop.permute.xlu0 %449
        %v451 = vld [vmem:[#allocation8] sm:$0xff]
        %v452 = vld [vmem:[#allocation8 + $0x8] sm:$0xff]
        %v453 = vmul.f32 %v437, %v451
        %v454 = vmul.f32 %v440, %v452
        %v455 = vld [vmem:[#allocation9] sm:$0xff]
        %v456 = vld [vmem:[#allocation9 + $0x8] sm:$0xff]
        %v457 = vmul.f32 %v444, %v455
        %v458 = vmul.f32 %v446, %v456
        %v459 = vadd.f32 %v453, %v457
        %v460 = vadd.f32 %v454, %v458
        %v461 = vld [vmem:[%s5] sm:$0xff]
        %v462 = vld [vmem:[%s5 + $0x8] sm:$0xff]
        %v463 = vmul.f32 %v448, %v461
        %v464 = vmul.f32 %v450, %v462
        %v465 = vadd.f32 %v459, %v463
        %v466 = vadd.f32 %v460, %v464
        %vm467 = vcmask 1048064
        %468 = vst.msk [vmem:[%s354] sm:$0xff] %vm467, %v465
        %469 = vst.msk [vmem:[%s354 + $0x8] sm:$0xff] %vm467, %v466
        %v470 = vpack.c.bf16 %v466, %v465
        %v471 = vlaneseq
        %v472 = vshrl.u32 %v471, 7
        %v473 = vadd.s32 %v472, 8
        %v474 = vadd.s32 %v472, 16
        %v475 = vadd.s32 %v472, 24
        %vm476 = vcmp.lt.s32.totalorder %v472, 0
        %v477 = vsub.s32 0, %v472
        %v478 = vsel %vm476, %v477, %v472
        %v479 = vshrl.u32 %v478, 4
        %v480 = vand.u32 %v478, 15
        %v481 = vsub.s32 0, %v480
        %v482 = vsel %vm476, %v481, %v480
        %vm483 = vcmp.lt.s32.totalorder %v473, 0
        %v484 = vsub.s32 0, %v473
        %v485 = vsel %vm483, %v484, %v473
        %v486 = vshrl.u32 %v485, 4
        %v487 = vand.u32 %v485, 15
        %v488 = vsub.s32 0, %v487
        %v489 = vsel %vm483, %v488, %v487
        %vm490 = vcmp.lt.s32.totalorder %v474, 0
        %v491 = vsub.s32 0, %v474
        %v492 = vsel %vm490, %v491, %v474
        %v493 = vshrl.u32 %v492, 4
        %v494 = vand.u32 %v492, 15
        %v495 = vsub.s32 0, %v494
        %v496 = vsel %vm490, %v495, %v494
        %vm497 = vcmp.lt.s32.totalorder %v475, 0
        %v498 = vsub.s32 0, %v475
        %v499 = vsel %vm497, %v498, %v475
        %v500 = vshrl.u32 %v499, 4
        %v501 = vand.u32 %v499, 15
        %v502 = vsub.s32 0, %v501
        %v503 = vsel %vm497, %v502, %v501
        %vm504 = vcmp.ne.s32.totalorder %v482, 0
        %vm505 = vcmp.ne.s32.totalorder %v489, 0
        %vm506 = vcmp.ne.s32.totalorder %v496, 0
        %vm507 = vcmp.ne.s32.totalorder %v503, 0
        %vm508 = vcmp.lt.s32.totalorder %v482, 0
        %vm509 = vcmp.lt.s32.totalorder %v489, 0
        %vm510 = vcmp.lt.s32.totalorder %v496, 0
        %vm511 = vcmp.lt.s32.totalorder %v503, 0
        %vm512 = vmand %vm508, %vm504
        %vm513 = vmand %vm509, %vm505
        %vm514 = vmand %vm510, %vm506
        %vm515 = vmand %vm511, %vm507
        %v516 = vadd.s32 %v482, 16
        %v517 = vadd.s32 %v489, 16
        %v518 = vadd.s32 %v496, 16
        %v519 = vadd.s32 %v503, 16
        %v520 = vsel %vm512, %v516, %v482
        %v521 = vsel %vm513, %v517, %v489
        %v522 = vsel %vm514, %v518, %v496
        %v523 = vsel %vm515, %v519, %v503
        %v524 = vlaneseq
        %v525 = vand.u32 %v524, 127
        %vm526 = vcmp.ge.s32.totalorder %v520, %v525
        %vm527 = vcmp.ge.s32.totalorder %v521, %v525
        %vm528 = vcmp.ge.s32.totalorder %v522, %v525
        %vm529 = vcmp.ge.s32.totalorder %v523, %v525
        %531 = vrot.lane.b32.xlu0 %v470, 112
        %v532 = vpop.permute.xlu0 %531
        %533 = vrot.lane.b32.xlu0 %v470, 64
        %v534 = vpop.permute.xlu0 %533
        %vm535 = vcmask 130048
        %v537 = vsel %vm535, %v470, 0
        %v540 = vsel %vm535, %v532, 0
        %v543 = vsel %vm535, %v534, 0
        %545 = vmatprep.subr.bf16.mxu0 0
        %546 = vmatpush1.bf16.xpose.msra.mxu0 %v543
        %547 = vmatprep.subr.bf16.mxu0 0
        %548 = vmatpush1.bf16.xpose.msra.mxu0 0
        %549 = vmatprep.subr.bf16.mxu0 0
        %550 = vmatpush1.bf16.xpose.msra.mxu0 0
        %551 = vmatprep.subr.bf16.mxu0 0
        %552 = vmatpush1.bf16.xpose.msra.mxu0 0
        %553 = vmatprep.subr.bf16.mxu0 0
        %554 = vmatpush1.bf16.xpose.msra.mxu0 0
        %555 = vmatprep.subr.bf16.mxu0 0
        %556 = vmatpush1.bf16.xpose.msra.mxu0 0
        %557 = vmatprep.subr.bf16.mxu0 0
        %558 = vmatpush1.bf16.xpose.msra.mxu0 0
        %559 = vmatprep.subr.bf16.mxu0 0
        %560 = vmatpush1.bf16.xpose.msra.mxu0 0
        %561 = vmatprep.subr.bf16.mxu0 0
        %562 = vmatpush1.bf16.xpose.msra.mxu0 0
        %563 = vmatprep.subr.bf16.mxu0 0
        %564 = vmatpush1.bf16.xpose.msra.mxu0 0
        %565 = vmatprep.subr.bf16.mxu0 0
        %566 = vmatpush1.bf16.xpose.msra.mxu0 0
        %567 = vmatprep.subr.bf16.mxu0 0
        %568 = vmatpush1.bf16.xpose.msra.mxu0 0
        %569 = vmatprep.subr.bf16.mxu0 0
        %570 = vmatpush1.bf16.xpose.msra.mxu0 0
        %571 = vmatprep.subr.bf16.mxu0 0
        %572 = vmatpush1.bf16.xpose.msra.mxu0 0
        %573 = vmatprep.subr.bf16.mxu0 0
        %574 = vmatpush1.bf16.xpose.msra.mxu0 0
        %575 = vmatprep.subr.bf16.mxu0 0
        %576 = vmatpush1.bf16.xpose.msra.mxu0 0
        %577 = vmatprep.mubr.bf16.mxu0 0
        %578 = vmatmul.mubr.bf16.gmra.mrb[0].mxu0 %v537
        %v579 = vpop.f32.mrb[0].mxu0
        %v580 = vadd.f32 0.0, %v579
        %v581 = vpop.f32.mrb[0].mxu0
        %v582 = vpop.f32.mrb[0].mxu0
        %v583 = vadd.f32 0.0, %v582
        %v584 = vpop.f32.mrb[0].mxu0
        %585 = vmatprep.mubr.bf16.mxu0 0
        %586 = vmatmul.mubr.bf16.gmra.mrb[0].mxu0 %v540
        %v587 = vpop.f32.mrb[0].mxu0
        %v588 = vadd.f32 0.0, %v587
        %v589 = vpop.f32.mrb[0].mxu0
        %v590 = vpop.f32.mrb[0].mxu0
        %v591 = vadd.f32 0.0, %v590
        %v592 = vpop.f32.mrb[0].mxu0
        %593 = vdwg.mxu0
        %v594 = vsel %vm526, %v580, -1e+30
        %v595 = vsel %vm527, %v583, -1e+30
        %v596 = vsel %vm528, %v588, -1e+30
        %v597 = vsel %vm529, %v591, -1e+30
        %v598 = vsel %vm535, %v594, -inf
        %599 = vmax.xlane.f32.xlu0 %v598
        %v600 = vpop.xlane.xlu0 %599
        %v601 = vsel %vm535, %v595, -inf
        %602 = vmax.xlane.f32.xlu0 %v601
        %v603 = vpop.xlane.xlu0 %602
        %v604 = vsel %vm535, %v596, -inf
        %605 = vmax.xlane.f32.xlu0 %v604
        %v606 = vpop.xlane.xlu0 %605
        %v607 = vsel %vm535, %v597, -inf
        %608 = vmax.xlane.f32.xlu0 %v607
        %v609 = vpop.xlane.xlu0 %608
        %v610 = vsub.f32 %v594, %v600
        %v611 = vsub.f32 %v595, %v603
        %v612 = vsub.f32 %v596, %v606
        %v613 = vsub.f32 %v597, %v609
        %v614 = vmul.f32 %v610, 1.442695
        %v615 = vpow.pop %v614
        %v616 = vmul.f32 %v611, 1.442695
        %v617 = vpow.pop %v616
        %v618 = vmul.f32 %v612, 1.442695
        %v619 = vpow.pop %v618
        %v620 = vmul.f32 %v613, 1.442695
        %v621 = vpow.pop %v620
        %v622 = vsel %vm535, %v615, 0.0
        %623 = vadd.xlane.f32.xlu0 %v622
        %v624 = vpop.xlane.xlu0 %623
        %v625 = vsel %vm535, %v617, 0.0
        %626 = vadd.xlane.f32.xlu0 %v625
        %v627 = vpop.xlane.xlu0 %626
        %v628 = vsel %vm535, %v619, 0.0
        %629 = vadd.xlane.f32.xlu0 %v628
        %v630 = vpop.xlane.xlu0 %629
        %v631 = vsel %vm535, %v621, 0.0
        %632 = vadd.xlane.f32.xlu0 %v631
        %v633 = vpop.xlane.xlu0 %632
        %v634 = vrcp.pop %v624
        %v635 = vrcp.pop %v627
        %v636 = vrcp.pop %v630
        %v637 = vrcp.pop %v633
        %v638 = vmul.f32 %v615, %v634
        %v639 = vmul.f32 %v617, %v635
        %v640 = vmul.f32 %v619, %v636
        %v641 = vmul.f32 %v621, %v637
        %v642 = vpack.c.bf16 %v639, %v638
        %v643 = vpack.c.bf16 %v641, %v640
        %644 = vrot.lane.b32.xlu0 %v470, 32
        %v645 = vpop.permute.xlu0 %644
        %v648 = vsel %vm535, %v642, 0
        %v651 = vsel %vm535, %v643, 0
        %653 = vmatprep.subr.bf16.mxu0 0
        %654 = vmatpush1.bf16.msra.mxu0 %v645
        %655 = vmatprep.subr.bf16.mxu0 0
        %656 = vmatpush1.bf16.msra.mxu0 0
        %657 = vmatprep.subr.bf16.mxu0 0
        %658 = vmatpush1.bf16.msra.mxu0 0
        %659 = vmatprep.subr.bf16.mxu0 0
        %660 = vmatpush1.bf16.msra.mxu0 0
        %661 = vmatprep.subr.bf16.mxu0 0
        %662 = vmatpush1.bf16.msra.mxu0 0
        %663 = vmatprep.subr.bf16.mxu0 0
        %664 = vmatpush1.bf16.msra.mxu0 0
        %665 = vmatprep.subr.bf16.mxu0 0
        %666 = vmatpush1.bf16.msra.mxu0 0
        %667 = vmatprep.subr.bf16.mxu0 0
        %668 = vmatpush1.bf16.msra.mxu0 0
        %669 = vmatprep.subr.bf16.mxu0 0
        %670 = vmatpush1.bf16.msra.mxu0 0
        %671 = vmatprep.subr.bf16.mxu0 0
        %672 = vmatpush1.bf16.msra.mxu0 0
        %673 = vmatprep.subr.bf16.mxu0 0
        %674 = vmatpush1.bf16.msra.mxu0 0
        %675 = vmatprep.subr.bf16.mxu0 0
        %676 = vmatpush1.bf16.msra.mxu0 0
        %677 = vmatprep.subr.bf16.mxu0 0
        %678 = vmatpush1.bf16.msra.mxu0 0
        %679 = vmatprep.subr.bf16.mxu0 0
        %680 = vmatpush1.bf16.msra.mxu0 0
        %681 = vmatprep.subr.bf16.mxu0 0
        %682 = vmatpush1.bf16.msra.mxu0 0
        %683 = vmatprep.subr.bf16.mxu0 0
        %684 = vmatpush1.bf16.msra.mxu0 0
        %685 = vmatprep.mubr.bf16.mxu0 0
        %686 = vmatmul.mubr.bf16.gmra.mrb[0].mxu0 %v648
        %v687 = vpop.f32.mrb[0].mxu0
        %v688 = vadd.f32 0.0, %v687
        %v689 = vpop.f32.mrb[0].mxu0
        %v690 = vpop.f32.mrb[0].mxu0
        %v691 = vadd.f32 0.0, %v690
        %v692 = vpop.f32.mrb[0].mxu0
        %693 = vmatprep.mubr.bf16.mxu0 0
        %694 = vmatmul.mubr.bf16.gmra.mrb[0].mxu0 %v651
        %v695 = vpop.f32.mrb[0].mxu0
        %v696 = vadd.f32 0.0, %v695
        %v697 = vpop.f32.mrb[0].mxu0
        %v698 = vpop.f32.mrb[0].mxu0
        %v699 = vadd.f32 0.0, %v698
        %v700 = vpop.f32.mrb[0].mxu0
        %701 = vdwg.mxu0
        %v702 = vpack.c.bf16 %v691, %v688
        %703 = vst.msk [vmem:[#allocation2] sm:$0xff] %vm535, %v702
        %v704 = vpack.c.bf16 %v699, %v696
        %706 = vrot.lane.b32.xlu0 %v704, 16
        %v707 = vpop.permute.xlu0 %706
        %vm709 = vcmask 261248
        %710 = vst.msk [vmem:[#allocation2] sm:$0xff] %vm709, %v707
        %711 = vrot.lane.b32.xlu0 %v470, 96
        %v712 = vpop.permute.xlu0 %711
        %713 = vrot.lane.b32.xlu0 %v532, 96
        %v714 = vpop.permute.xlu0 %713
        %715 = vrot.lane.b32.xlu0 %v470, 48
        %v716 = vpop.permute.xlu0 %715
        %v718 = vsel %vm535, %v712, 0
        %v721 = vsel %vm535, %v714, 0
        %v724 = vsel %vm535, %v716, 0
        %726 = vmatprep.subr.bf16.mxu0 0
        %727 = vmatpush1.bf16.xpose.msra.mxu0 %v724
        %728 = vmatprep.subr.bf16.mxu0 0
        %729 = vmatpush1.bf16.xpose.msra.mxu0 0
        %730 = vmatprep.subr.bf16.mxu0 0
        %731 = vmatpush1.bf16.xpose.msra.mxu0 0
        %732 = vmatprep.subr.bf16.mxu0 0
        %733 = vmatpush1.bf16.xpose.msra.mxu0 0
        %734 = vmatprep.subr.bf16.mxu0 0
        %735 = vmatpush1.bf16.xpose.msra.mxu0 0
        %736 = vmatprep.subr.bf16.mxu0 0
        %737 = vmatpush1.bf16.xpose.msra.mxu0 0
        %738 = vmatprep.subr.bf16.mxu0 0
        %739 = vmatpush1.bf16.xpose.msra.mxu0 0
        %740 = vmatprep.subr.bf16.mxu0 0
        %741 = vmatpush1.bf16.xpose.msra.mxu0 0
        %742 = vmatprep.subr.bf16.mxu0 0
        %743 = vmatpush1.bf16.xpose.msra.mxu0 0
        %744 = vmatprep.subr.bf16.mxu0 0
        %745 = vmatpush1.bf16.xpose.msra.mxu0 0
        %746 = vmatprep.subr.bf16.mxu0 0
        %747 = vmatpush1.bf16.xpose.msra.mxu0 0
        %748 = vmatprep.subr.bf16.mxu0 0
        %749 = vmatpush1.bf16.xpose.msra.mxu0 0
        %750 = vmatprep.subr.bf16.mxu0 0
        %751 = vmatpush1.bf16.xpose.msra.mxu0 0
        %752 = vmatprep.subr.bf16.mxu0 0
        %753 = vmatpush1.bf16.xpose.msra.mxu0 0
        %754 = vmatprep.subr.bf16.mxu0 0
        %755 = vmatpush1.bf16.xpose.msra.mxu0 0
        %756 = vmatprep.subr.bf16.mxu0 0
        %757 = vmatpush1.bf16.xpose.msra.mxu0 0
        %758 = vmatprep.mubr.bf16.mxu0 0
        %759 = vmatmul.mubr.bf16.gmra.mrb[0].mxu0 %v718
        %v760 = vpop.f32.mrb[0].mxu0
        %v761 = vadd.f32 0.0, %v760
        %v762 = vpop.f32.mrb[0].mxu0
        %v763 = vpop.f32.mrb[0].mxu0
        %v764 = vadd.f32 0.0, %v763
        %v765 = vpop.f32.mrb[0].mxu0
        %766 = vmatprep.mubr.bf16.mxu0 0
        %767 = vmatmul.mubr.bf16.gmra.mrb[0].mxu0 %v721
        %v768 = vpop.f32.mrb[0].mxu0
        %v769 = vadd.f32 0.0, %v768
        %v770 = vpop.f32.mrb[0].mxu0
        %v771 = vpop.f32.mrb[0].mxu0
        %v772 = vadd.f32 0.0, %v771
        %v773 = vpop.f32.mrb[0].mxu0
        %774 = vdwg.mxu0
        %v775 = vsel %vm526, %v761, -1e+30
        %v776 = vsel %vm527, %v764, -1e+30
        %v777 = vsel %vm528, %v769, -1e+30
        %v778 = vsel %vm529, %v772, -1e+30
        %v779 = vsel %vm535, %v775, -inf
        %780 = vmax.xlane.f32.xlu0 %v779
        %v781 = vpop.xlane.xlu0 %780
        %v782 = vsel %vm535, %v776, -inf
        %783 = vmax.xlane.f32.xlu0 %v782
        %v784 = vpop.xlane.xlu0 %783
        %v785 = vsel %vm535, %v777, -inf
        %786 = vmax.xlane.f32.xlu0 %v785
        %v787 = vpop.xlane.xlu0 %786
        %v788 = vsel %vm535, %v778, -inf
        %789 = vmax.xlane.f32.xlu0 %v788
        %v790 = vpop.xlane.xlu0 %789
        %v791 = vsub.f32 %v775, %v781
        %v792 = vsub.f32 %v776, %v784
        %v793 = vsub.f32 %v777, %v787
        %v794 = vsub.f32 %v778, %v790
        %v795 = vmul.f32 %v791, 1.442695
        %v796 = vpow.pop %v795
        %v797 = vmul.f32 %v792, 1.442695
        %v798 = vpow.pop %v797
        %v799 = vmul.f32 %v793, 1.442695
        %v800 = vpow.pop %v799
        %v801 = vmul.f32 %v794, 1.442695
        %v802 = vpow.pop %v801
        %v803 = vsel %vm535, %v796, 0.0
        %804 = vadd.xlane.f32.xlu0 %v803
        %v805 = vpop.xlane.xlu0 %804
        %v806 = vsel %vm535, %v798, 0.0
        %807 = vadd.xlane.f32.xlu0 %v806
        %v808 = vpop.xlane.xlu0 %807
        %v809 = vsel %vm535, %v800, 0.0
        %810 = vadd.xlane.f32.xlu0 %v809
        %v811 = vpop.xlane.xlu0 %810
        %v812 = vsel %vm535, %v802, 0.0
        %813 = vadd.xlane.f32.xlu0 %v812
        %v814 = vpop.xlane.xlu0 %813
        %v815 = vrcp.pop %v805
        %v816 = vrcp.pop %v808
        %v817 = vrcp.pop %v811
        %v818 = vrcp.pop %v814
        %v819 = vmul.f32 %v796, %v815
        %v820 = vmul.f32 %v798, %v816
        %v821 = vmul.f32 %v800, %v817
        %v822 = vmul.f32 %v802, %v818
        %v823 = vpack.c.bf16 %v820, %v819
        %v824 = vpack.c.bf16 %v822, %v821
        %825 = vrot.lane.b32.xlu0 %v470, 16
        %v826 = vpop.permute.xlu0 %825
        %v829 = vsel %vm535, %v823, 0
        %v832 = vsel %vm535, %v824, 0
        %834 = vmatprep.subr.bf16.mxu0 0
        %835 = vmatpush1.bf16.msra.mxu0 %v826
        %836 = vmatprep.subr.bf16.mxu0 0
        %837 = vmatpush1.bf16.msra.mxu0 0
        %838 = vmatprep.subr.bf16.mxu0 0
        %839 = vmatpush1.bf16.msra.mxu0 0
        %840 = vmatprep.subr.bf16.mxu0 0
        %841 = vmatpush1.bf16.msra.mxu0 0
        %842 = vmatprep.subr.bf16.mxu0 0
        %843 = vmatpush1.bf16.msra.mxu0 0
        %844 = vmatprep.subr.bf16.mxu0 0
        %845 = vmatpush1.bf16.msra.mxu0 0
        %846 = vmatprep.subr.bf16.mxu0 0
        %847 = vmatpush1.bf16.msra.mxu0 0
        %848 = vmatprep.subr.bf16.mxu0 0
        %849 = vmatpush1.bf16.msra.mxu0 0
        %850 = vmatprep.subr.bf16.mxu0 0
        %851 = vmatpush1.bf16.msra.mxu0 0
        %852 = vmatprep.subr.bf16.mxu0 0
        %853 = vmatpush1.bf16.msra.mxu0 0
        %854 = vmatprep.subr.bf16.mxu0 0
        %855 = vmatpush1.bf16.msra.mxu0 0
        %856 = vmatprep.subr.bf16.mxu0 0
        %857 = vmatpush1.bf16.msra.mxu0 0
        %858 = vmatprep.subr.bf16.mxu0 0
        %859 = vmatpush1.bf16.msra.mxu0 0
        %860 = vmatprep.subr.bf16.mxu0 0
        %861 = vmatpush1.bf16.msra.mxu0 0
        %862 = vmatprep.subr.bf16.mxu0 0
        %863 = vmatpush1.bf16.msra.mxu0 0
        %864 = vmatprep.subr.bf16.mxu0 0
        %865 = vmatpush1.bf16.msra.mxu0 0
        %866 = vmatprep.mubr.bf16.mxu0 0
        %867 = vmatmul.mubr.bf16.gmra.mrb[0].mxu0 %v829
        %v868 = vpop.f32.mrb[0].mxu0
        %v869 = vadd.f32 0.0, %v868
        %v870 = vpop.f32.mrb[0].mxu0
        %v871 = vpop.f32.mrb[0].mxu0
        %v872 = vadd.f32 0.0, %v871
        %v873 = vpop.f32.mrb[0].mxu0
        %874 = vmatprep.mubr.bf16.mxu0 0
        %875 = vmatmul.mubr.bf16.gmra.mrb[0].mxu0 %v832
        %v876 = vpop.f32.mrb[0].mxu0
        %v877 = vadd.f32 0.0, %v876
        %v878 = vpop.f32.mrb[0].mxu0
        %v879 = vpop.f32.mrb[0].mxu0
        %v880 = vadd.f32 0.0, %v879
        %v881 = vpop.f32.mrb[0].mxu0
        %882 = vdwg.mxu0
        %v883 = vpack.c.bf16 %v872, %v869
        %885 = vrot.lane.b32.xlu0 %v883, 32
        %v886 = vpop.permute.xlu0 %885
        %vm888 = vcmask 392448
        %889 = vst.msk [vmem:[#allocation2] sm:$0xff] %vm888, %v886
        %v890 = vpack.c.bf16 %v880, %v877
        %892 = vrot.lane.b32.xlu0 %v890, 48
        %v893 = vpop.permute.xlu0 %892
        %vm895 = vcmask 523648
        %896 = vst.msk [vmem:[#allocation2] sm:$0xff] %vm895, %v893
        %v897 = vld [vmem:[#allocation2] sm:$0xff]
        %v898 = vld [vmem:[#allocation11] sm:$0xf]
        %v899 = vld [vmem:[#allocation11 + $0x4] sm:$0xf]
        %v900 = vld [vmem:[#allocation11 + $0x8] sm:$0xf]
        %v901 = vld [vmem:[#allocation11 + $0xc] sm:$0xf]
        %v902 = vld [vmem:[#allocation11 + $0x10] sm:$0xf]
        %v903 = vld [vmem:[#allocation11 + $0x14] sm:$0xf]
        %v904 = vld [vmem:[#allocation11 + $0x18] sm:$0xf]
        %v905 = vld [vmem:[#allocation11 + $0x1c] sm:$0xf]
        %v914 = vunpack.c.l.b16 %v898
        %v915 = vunpack.c.l.b16 %v899
        %v916 = vunpack.c.l.b16 %v900
        %v917 = vunpack.c.l.b16 %v901
        %v918 = vunpack.c.l.b16 %v902
        %v919 = vunpack.c.l.b16 %v903
        %v920 = vunpack.c.l.b16 %v904
        %v921 = vunpack.c.l.b16 %v905
        %v922 = vpack.c.b16 %v915, %v914
        %v923 = vpack.c.b16 %v917, %v916
        %v924 = vpack.c.b16 %v919, %v918
        %v925 = vpack.c.b16 %v921, %v920
        %v931 = vsel %vm398, %v897, 0
        %933 = vmatprep.subr.bf16.mxu0 0
        %934 = vmatpush1.bf16.msra.mxu0 %v922
        %935 = vmatprep.subr.bf16.mxu0 0
        %936 = vmatpush1.bf16.msra.mxu0 %v923
        %937 = vmatprep.subr.bf16.mxu0 0
        %938 = vmatpush1.bf16.msra.mxu0 %v924
        %939 = vmatprep.subr.bf16.mxu0 0
        %940 = vmatpush1.bf16.msra.mxu0 %v925
        %941 = vmatprep.subr.bf16.mxu0 0
        %942 = vmatpush1.bf16.msra.mxu0 0
        %943 = vmatprep.subr.bf16.mxu0 0
        %944 = vmatpush1.bf16.msra.mxu0 0
        %945 = vmatprep.subr.bf16.mxu0 0
        %946 = vmatpush1.bf16.msra.mxu0 0
        %947 = vmatprep.subr.bf16.mxu0 0
        %948 = vmatpush1.bf16.msra.mxu0 0
        %949 = vmatprep.subr.bf16.mxu0 0
        %950 = vmatpush1.bf16.msra.mxu0 0
        %951 = vmatprep.subr.bf16.mxu0 0
        %952 = vmatpush1.bf16.msra.mxu0 0
        %953 = vmatprep.subr.bf16.mxu0 0
        %954 = vmatpush1.bf16.msra.mxu0 0
        %955 = vmatprep.subr.bf16.mxu0 0
        %956 = vmatpush1.bf16.msra.mxu0 0
        %957 = vmatprep.subr.bf16.mxu0 0
        %958 = vmatpush1.bf16.msra.mxu0 0
        %959 = vmatprep.subr.bf16.mxu0 0
        %960 = vmatpush1.bf16.msra.mxu0 0
        %961 = vmatprep.subr.bf16.mxu0 0
        %962 = vmatpush1.bf16.msra.mxu0 0
        %963 = vmatprep.subr.bf16.mxu0 0
        %964 = vmatpush1.bf16.msra.mxu0 0
        %965 = vmatprep.mubr.bf16.mxu0 0
        %966 = vmatmul.mubr.bf16.gmra.mrb[0].mxu0 %v931
        %v967 = vpop.f32.mrb[0].mxu0
        %v968 = vadd.f32 0.0, %v967
        %v969 = vpop.f32.mrb[0].mxu0
        %v970 = vpop.f32.mrb[0].mxu0
        %v971 = vadd.f32 0.0, %v970
        %v972 = vpop.f32.mrb[0].mxu0
        %973 = vdwg.mxu0
        %974 = vst.msk [vmem:[%s354] sm:$0xff] %vm398, %v968
        %975 = vst.msk [vmem:[%s354 + $0x8] sm:$0xff] %vm398, %v971
        %s976 = sand.u32 %s186, 1
        %s977 = scalar_lea.sflag [#allocation5], %s976
        %s978 = sand.u32 %s186, 1
        %s979 = smul.addr %s978, 16
        %s980 = scalar_lea.vmem [#allocation12], %s979
        // Predicated region
        $region69: #{tpu_custom_call.1} parent=47 // pred_check
          %p981 = pneg %p196
        $region70: #{tpu_custom_call.1} parent=47 // pred_check_branch
          %983 = sbr.rel (%p981) target = $region72
        $region71: #{tpu_custom_call.1} parent=47 // pred_region
          %s985 = ssub.s32 256, 256
          %986 = vsyncadd %s977, %s985
          %s987 = smul.addr %s26, 128
          %s988 = scalar_lea.hbm %s7, %s987
          %s989 = sshll.u32 %s980, 4
          %s990 = int_to_ptr.vmem [resolvable:$true] %s989
          %995 = dma.vmem_to_hbm [thread:$0]  %s990, 256, %s988, %s977, 128, 256, 8
        $region72: #{tpu_custom_call.1} parent=47 // pred_fallthru
          _
      $region48: #{tpu_custom_call.1} parent=5 // pred_fallthru
        _
      %p996 = scmp.le.s32.totalorder 2, %s21
      // Predicated region
      $region73: #{tpu_custom_call.1} parent=5 // pred_check
        %p997 = pneg %p996
      $region74: #{tpu_custom_call.1} parent=5 // pred_check_branch
        %999 = sbr.rel (%p997) target = $region76
      $region75: #{tpu_custom_call.1} parent=5 // pred_region
        %s1000 = ssub.s32 %s21, 2
        // Predicated region
        $region77: #{tpu_custom_call.1} parent=75 // pred_check
          %p1001 = pneg %p202
        $region78: #{tpu_custom_call.1} parent=75 // pred_check_branch
          %1003 = sbr.rel (%p1001) target = $region80
        $region79: #{tpu_custom_call.1} parent=75 // pred_region
          %s1004 = sand.u32 %s187, 1
          %s1005 = scalar_lea.sflag [#allocation5], %s1004
          %s1006 = sand.u32 %s187, 1
          %s1007 = smul.addr %s1006, 16
          %s1008 = scalar_lea.vmem [#allocation12], %s1007
          %1009 = dma.done %s1005, 256
        $region80: #{tpu_custom_call.1} parent=75 // pred_fallthru
          _
      $region76: #{tpu_custom_call.1} parent=5 // pred_fallthru
        _
    $region6: #{tpu_custom_call.1} parent=1 // loop_footer
      %s25 = sadd.s32 1, %s21
    $region7: #{tpu_custom_call.1} parent=1 // loop_footer_branch
      %20 = sbr.rel target = $region3
    $region8: #{tpu_custom_call.1} parent=1 // loop_exit
      _
    %1010 = vsyncpa [#allocation4], 1
    %s1011 = scalar_lea.sflag [#allocation4], 1
    %1012 = vsyncpa %s1011, 1
    %1013 = vsyncpa [#allocation7], 1
    %1014 = vsyncpa [#allocation10], 1
    %1015 = vsyncpa [#allocation5], 1
    %s1016 = scalar_lea.sflag [#allocation5], 1
    %1017 = vsyncpa %s1016, 1

</llo_original>
